<compile_context>
chip_gen: v5e
topology: v5e:2x2
jax: 0.10.0
libtpu: 0.0.40
codegen_flags: <defaults>
</compile_context>

<pallas_src>
import functools

import jax
import jax.numpy as jnp
from jax import lax
from jax.experimental import pallas as pl
from jax.experimental.pallas import tpu as pltpu


# ---------------------------------------------------------------------------
# Kernels
# ---------------------------------------------------------------------------

def _embed_resident_kernel(ids_ref, emb_ref, pos_ref, out_ref, *, precision):
    # ids_ref: VMEM (TILE, 1) int32   -- token ids for this tile of flat tokens
    # emb_ref: VMEM (V, D)            -- whole table (grid-invariant block)
    # pos_ref: VMEM (TILE, D)         -- positional rows for this seq tile
    # out_ref: VMEM (TILE, D)
    tile = ids_ref.shape[0]
    vocab = emb_ref.shape[0]

    ids = ids_ref[...]                                                # (TILE, 1)
    iota = lax.broadcasted_iota(jnp.int32, (tile, vocab), 1)          # (TILE, V)
    one_hot = (ids == iota).astype(emb_ref.dtype)                     # (TILE, V)

    # Vectorized gather on the (otherwise idle) MXU; exact row select.
    gathered = jnp.dot(one_hot, emb_ref[...],
                       preferred_element_type=jnp.float32,
                       precision=precision)                           # (TILE, D)

    out_ref[...] = (gathered + pos_ref[...]).astype(out_ref.dtype)
    # TODO(synk): training-mode nn.Dropout (prng_random_bits mask + 1/(1-p)
    # scaling) not applied; eval mode is identity.


def _embed_chunked_kernel(ids_ref, emb_ref, pos_ref, out_ref, acc_ref, *,
                          precision):
    # Large-vocab path: the table never lives whole in VMEM.  Grid axis 2
    # streams (VTILE, D) table chunks; acc_ref accumulates the one-hot gather.
    v = pl.program_id(2)
    tile = ids_ref.shape[0]
    vtile = emb_ref.shape[0]

    @pl.when(v == 0)
    def _init():
        acc_ref[...] = jnp.zeros_like(acc_ref)

    ids = ids_ref[...]                                                # (TILE, 1)
    local = ids - v * vtile                                           # chunk-local id
    iota = lax.broadcasted_iota(jnp.int32, (tile, vtile), 1)
    one_hot = (local == iota).astype(emb_ref.dtype)                   # (TILE, VTILE)

    acc_ref[...] += jnp.dot(one_hot, emb_ref[...],
                            preferred_element_type=jnp.float32,
                            precision=precision)

    @pl.when(v == pl.num_programs(2) - 1)
    def _finalize():
        out_ref[...] = (acc_ref[...] + pos_ref[...]).astype(out_ref.dtype)


# ---------------------------------------------------------------------------
# Wrapper
# ---------------------------------------------------------------------------

def _largest_mult8_divisor(n, max_val):
    best = None
    for t in range(8, min(n, max_val) + 1, 8):
        if n % t == 0:
            best = t
    if best is None:
        # TODO(synk): general (prime / non-multiple-of-8) extents need padding
        # or a masked last tile via pl.cdiv + pl.when.
        raise ValueError(f"{n} has no multiple-of-8 divisor <= {max_val}")
    return best


def _pick_token_tile(seq_len, max_tile=1024):
    # Mem-bound kernel: bigger tiles amortize the ~0.35 us/step overhead
    # (128 rows ~29% of HBM roofline, 512 ~85%, 1024 ~86%).
    return _largest_mult8_divisor(seq_len, max_tile)


def _pick_vocab_tile(vocab, max_tile=256):
    # 256 matches the v6e/v7x MXU contraction depth.
    return _largest_mult8_divisor(vocab, max_tile)


# Tables above this stay out of VMEM (chunked path).  4 MiB keeps the resident
# table (double-buffered by the pipeline) well under v7x's 64 MiB VMEM / 32 MiB
# scoped default and v5e's 16 MiB scoped default.
_RESIDENT_TABLE_BYTES = 4 * 1024 * 1024
_VMEM_LIMIT_BYTES = 48 * 1024 * 1024   # > scoped defaults, < v7x physical 64 MiB


def transformer_embedding(ids, emb_table, pos_enc, *, tokens_per_tile=None,
                          vocab_tile=None, table_resident=None):
    """ids: (B, S) int; emb_table: (V, D); pos_enc: (S_max, D) -> (B, S, D)."""
    B, S = ids.shape
    V, D = emb_table.shape
    pos = pos_enc[:S, :].astype(emb_table.dtype)        # PositionalEmbedding.forward
    out_dtype = emb_table.dtype

    tile = tokens_per_tile if tokens_per_tile is not None else _pick_token_tile(S)
    assert tile % 8 == 0 and S % tile == 0, (tile, S)
    tiles_per_seq = S // tile

    ids_flat = ids.reshape(B * S, 1).astype(jnp.int32)
    # TODO(synk): a per-row DMA-gather variant would carry ids via
    # num_scalar_prefetch=1 (SMEM) to drive data-dependent copy addresses; the
    # one-hot paths below don't need it.

    # One-hot x f32 needs HIGHEST to stay an exact row select; one-hot x bf16 is
    # already exact in a single MXU pass.
    precision = (lax.Precision.HIGHEST if emb_table.dtype == jnp.float32
                 else lax.Precision.DEFAULT)

    table_bytes = V * D * jnp.dtype(emb_table.dtype).itemsize
    if table_resident is None:
        table_resident = table_bytes <= _RESIDENT_TABLE_BYTES

    if table_resident:
        # 2-D grid: (seq_tiles, batch); batch innermost so the pos block index
        # is unchanged across consecutive steps -> fetched once per seq tile.
        # The table's block index is constant over the whole grid, so it is
        # DMA'd exactly once; its (small, gated <= 4 MiB) second pipeline
        # buffer is negligible, so we skip pl.Buffered(1) here.
        grid_spec = pltpu.PrefetchScalarGridSpec(
            num_scalar_prefetch=0,
            grid=(tiles_per_seq, B),
            in_specs=[
                pl.BlockSpec((tile, 1), lambda t, b: (b * tiles_per_seq + t, 0)),
                pl.BlockSpec((V, D), lambda t, b: (0, 0)),
                pl.BlockSpec((tile, D), lambda t, b: (t, 0)),
            ],
            out_specs=pl.BlockSpec((tile, D),
                                   lambda t, b: (b * tiles_per_seq + t, 0)),
        )
        kernel = functools.partial(_embed_resident_kernel, precision=precision)
        dims = ("parallel", "arbitrary")
    else:
        vtile = vocab_tile if vocab_tile is not None else _pick_vocab_tile(V)
        assert vtile % 8 == 0 and V % vtile == 0, (vtile, V)
        # 3-D grid: vocab-chunk axis innermost (reduction, "arbitrary"); pos
        # block index still constant across the two inner axes.
        grid_spec = pltpu.PrefetchScalarGridSpec(
            num_scalar_prefetch=0,
            grid=(tiles_per_seq, B, V // vtile),
            in_specs=[
                pl.BlockSpec((tile, 1),
                             lambda t, b, v: (b * tiles_per_seq + t, 0)),
                pl.BlockSpec((vtile, D), lambda t, b, v: (v, 0)),
                pl.BlockSpec((tile, D), lambda t, b, v: (t, 0)),
            ],
            out_specs=pl.BlockSpec((tile, D),
                                   lambda t, b, v: (b * tiles_per_seq + t, 0)),
            scratch_shapes=[pltpu.VMEM((tile, D), jnp.float32)],
        )
        kernel = functools.partial(_embed_chunked_kernel, precision=precision)
        dims = ("parallel", "arbitrary", "arbitrary")

    out_flat = pl.pallas_call(
        kernel,
        out_shape=jax.ShapeDtypeStruct((B * S, D), out_dtype),
        grid_spec=grid_spec,
        compiler_params=pltpu.CompilerParams(
            dimension_semantics=dims,
            vmem_limit_bytes=_VMEM_LIMIT_BYTES),
    )(ids_flat, emb_table, pos)
    return out_flat.reshape(B, S, D)


def make_positional_encoding(seq_len, d_model):
    # Mirrors PositionalEmbedding.__init__ (even d_model, as the PyTorch code
    # effectively requires).
    pos = jnp.arange(seq_len, dtype=jnp.float32)[:, None]          # (S, 1)
    ind = jnp.arange(0, d_model, 2, dtype=jnp.float32)             # (D/2,)
    angles = pos / jnp.power(10000.0, ind / d_model)               # (S, D/2)
    enc = jnp.zeros((seq_len, d_model), dtype=jnp.float32)
    enc = enc.at[:, 0::2].set(jnp.sin(angles))
    enc = enc.at[:, 1::2].set(jnp.cos(angles))
    return enc


if __name__ == "__main__":
    B, S, D, V = 2, 64, 128, 64
    drop_prob = 0.1  # nn.Dropout(p) is identity at inference

    key = jax.random.PRNGKey(0)
    k_emb, k_ids = jax.random.split(key)
    emb_table = jax.random.normal(k_emb, (V, D), dtype=jnp.float32)  # nn.Embedding ~ N(0,1)
    ids = jax.random.randint(k_ids, (B, S), 0, V, dtype=jnp.int32)
    pos_enc = make_positional_encoding(S, D)

    # Pure-JAX reference of the PyTorch forward (eval mode; no sqrt(d_model) scale).
    ref = emb_table[ids] + pos_enc[None, :, :]

    # Path 1: small table -> VMEM-resident one-hot MXU gather (auto-selected),
    # tile picked automatically (here the whole sequence: 64 rows).
    out = jax.block_until_ready(transformer_embedding(ids, emb_table, pos_enc))
    assert out.shape == (B, S, D), out.shape
    assert out.dtype == jnp.float32
    assert jnp.allclose(out, ref, atol=1e-5), float(jnp.max(jnp.abs(out - ref)))

    # Path 2: large-vocab path (table streamed through VMEM in vocab chunks),
    # forced here with vocab_tile=32 so the accumulation loop is exercised.
    out2 = jax.block_until_ready(
        transformer_embedding(ids, emb_table, pos_enc,
                              table_resident=False, vocab_tile=32))
    assert jnp.allclose(out2, ref, atol=1e-5), float(jnp.max(jnp.abs(out2 - ref)))

    print("KERNEL_OK")
</pallas_src>

<mosaic_0001>
module attributes {stable_mosaic.version = 11 : i64} {
  func.func @_embed_resident_kernel(%arg0: i32, %arg1: i32, %arg2: memref<64x1xi32, #tpu.memory_space<vmem>>, %arg3: memref<64x128xf32, #tpu.memory_space<vmem>>, %arg4: memref<64x128xf32, #tpu.memory_space<vmem>>, %arg5: memref<64x128xf32, #tpu.memory_space<vmem>>) attributes {dimension_semantics = [#tpu.dimension_semantics<parallel>, #tpu.dimension_semantics<arbitrary>], iteration_bounds = array<i64: 1, 2>, scalar_prefetch = 0 : i64, scratch_operands = 0 : i64, tpu.core_type = #tpu.core_type<tc>, window_params = [{transform_indices = @transform_0, window_bounds = array<i64: 64, 1>}, {pipeline_mode = #tpu.pipeline_mode<synchronous>, transform_indices = @transform_1, window_bounds = array<i64: 64, 128>}, {transform_indices = @transform_2, window_bounds = array<i64: 64, 128>}, {transform_indices = @transform_3, window_bounds = array<i64: 64, 128>}]} {
    %c0 = arith.constant 0 : index
    %c0_0 = arith.constant 0 : index
    %0 = vector.load %arg2[%c0, %c0_0] : memref<64x1xi32, #tpu.memory_space<vmem>>, vector<64x1xi32>
    %1 = tpu.iota {dimensions = array<i32: 1>} : vector<64x64xi32>
    %2 = vector.broadcast %0 : vector<64x1xi32> to vector<64x64xi32>
    %3 = arith.cmpi eq, %2, %1 : vector<64x64xi32>
    %4 = arith.extui %3 : vector<64x64xi1> to vector<64x64xi32>
    %5 = arith.sitofp %4 : vector<64x64xi32> to vector<64x64xf32>
    %c0_1 = arith.constant 0 : index
    %c0_2 = arith.constant 0 : index
    %6 = vector.load %arg3[%c0_1, %c0_2] : memref<64x128xf32, #tpu.memory_space<vmem>>, vector<64x128xf32>
    %cst = arith.constant dense<0.000000e+00> : vector<64x128xf32>
    %7 = tpu.matmul %5, %6, %cst {dimension_numbers = #tpu.dot_dimension_numbers<[1], [0], [0], [1], [0, 0, 1, 1], [], []>, precision = #tpu.contract_precision<fp32>} : vector<64x64xf32>, vector<64x128xf32>, vector<64x128xf32> -> vector<64x128xf32>
    %c0_3 = arith.constant 0 : index
    %c0_4 = arith.constant 0 : index
    %8 = vector.load %arg4[%c0_3, %c0_4] : memref<64x128xf32, #tpu.memory_space<vmem>>, vector<64x128xf32>
    %9 = arith.addf %7, %8 : vector<64x128xf32>
    %c0_5 = arith.constant 0 : index
    %c0_6 = arith.constant 0 : index
    %10 = vector.load %arg5[%c0_5, %c0_6] : memref<64x128xf32, #tpu.memory_space<vmem>>, vector<64x128xf32>
    tpu.vector_store %arg5[%c0_5, %c0_6], %9 {strides = array<i32>} : memref<64x128xf32, #tpu.memory_space<vmem>>, vector<64x128xf32>,
    return
  }
  func.func @transform_0(%arg0: i32, %arg1: i32) -> (i32, i32) {
    %c1_i32 = arith.constant 1 : i32
    %0 = arith.muli %arg1, %c1_i32 : i32
    %1 = arith.addi %0, %arg0 : i32
    %c0_i32 = arith.constant 0 : i32
    %c0_i32_0 = arith.constant 0 : i32
    return %1, %c0_i32 : i32, i32
  }
  func.func @transform_1(%arg0: i32, %arg1: i32) -> (i32, i32) {
    %c0_i32 = arith.constant 0 : i32
    %c0_i32_0 = arith.constant 0 : i32
    %c0_i32_1 = arith.constant 0 : i32
    return %c0_i32, %c0_i32_0 : i32, i32
  }
  func.func @transform_2(%arg0: i32, %arg1: i32) -> (i32, i32) {
    %c0_i32 = arith.constant 0 : i32
    %c0_i32_0 = arith.constant 0 : i32
    return %arg0, %c0_i32 : i32, i32
  }
  func.func @transform_3(%arg0: i32, %arg1: i32) -> (i32, i32) {
    %c1_i32 = arith.constant 1 : i32
    %0 = arith.muli %arg1, %c1_i32 : i32
    %1 = arith.addi %0, %arg0 : i32
    %c0_i32 = arith.constant 0 : i32
    %c0_i32_0 = arith.constant 0 : i32
    return %1, %c0_i32 : i32, i32
  }
}

</mosaic_0001>

<llo_original>
// kernel: tpu_custom_call.1
$region0: #{tpu_custom_call.1}
  #allocation0 [shape = 'u32[]', space=smem, size = 0x4, offset = 0x4, fixed_abs, tag = 'smem constant byte address 0x4 - core index']
  #allocation1 [shape = 'u32[72,128]{1,0:T(1,128)}', space=vmem, size = 0x9000, scoped, tag = 'internal scratch']
  %s0 = inlined_call_operand.vmem [shape: s32[128,1], index: 0, kind: input, shape index: {}]
  %s1 = inlined_call_operand.vmem [shape: f32[64,128], index: 1, kind: input, shape index: {}]
  %s2 = inlined_call_operand.vmem [shape: f32[64,128], index: 2, kind: input, shape index: {}]
  %s3 = inlined_call_operand.hbm [shape: f32[128,128], index: 3, kind: output, shape index: {}]
  %s4 = sld [smem:[#allocation0]]
  $region45: #{tpu_custom_call.1} parent=0
    _
  %s6 = ssub.s32 1, %s4
  %s7 = scalar_select 0, %s6, %s4
  $region1: #{tpu_custom_call.1} parent=0
    #allocation2 [shape = 'u8[65536]{0}', space=vmem, size = 0x10000, scoped, tag = 'output window, operand 0']
    #allocation3 [shape = 's32[2]{0}', space=sflag, size = 0x8, scoped, tag = 'scoped memory for tpu_custom_call.1']
    %8 = vsyncpa [#allocation3], 0
    %s9 = scalar_lea.sflag [#allocation3], 1
    %10 = vsyncpa %s9, 0
    loop: start=0, step=1, limit=4
    $region2: #{tpu_custom_call.1} parent=1 // loop_pre_header
      _
    $region3: #{tpu_custom_call.1} parent=1 // loop_header
      %s12 = sphi 0, %s16
      %p13 = scmp.ge.s32.totalorder %s12, 4
      %s19 = sphi 0, %s31
      %s20 = sphi 0, %s27
      %s21 = sphi 0, %s19
      %s22 = sphi 0, %s20
      %s23 = sphi 0, %s21
      %s24 = sphi 0, %s22
      %s36 = sphi 0, %s38
      %s39 = sphi 0, %s36
      %s40 = sphi 0, %s39
      %s56 = sphi 0, %s40
      %s60 = sphi 0, %s60
      %s62 = sphi 0, %s60
      %s63 = sphi 0, %s62
      %s77 = sphi 0, %s63
      %s83 = sphi 0, %s85
      %s86 = sphi 0, %s83
      %s87 = sphi 0, %s86
      %s103 = sphi 0, %s87
      %s111 = sphi 0, %s113
      %s114 = sphi 0, %s111
      %s115 = sphi 0, %s114
      %s131 = sphi 0, %s115
    $region4: #{tpu_custom_call.1} parent=1 // loop_header_branch
      %15 = sbr.rel (%p13) target = $region8
    $region5: #{tpu_custom_call.1} parent=1 // loop_body
      %s17 = ssub.s32 %s12, 1
      %s18 = ssub.s32 %s12, 2
      %s25 = sadd.s32 1, %s20
      %p26 = scmp.ge.s32.totalorder %s25, 2
      %s27 = scalar_select %p26, 0, %s25
      %s28 = sadd.s32 1, %s19
      %s29 = scalar_select %p26, %s28, %s19
      %p30 = scmp.ge.s32.totalorder %s29, 1
      %s31 = scalar_select %p30, 0, %s29
      %s32 = sadd.s32 %s20, %s19
      %s33 = sadd.s32 %s27, %s31
      %s34 = ssub.s32 %s32, %s33
      %p35 = scmp.eq.s32.totalorder %s34, 0
      %s37 = sadd.s32 %s36, 1
      %s38 = scalar_select %p35, %s36, %s37
      %p41 = pneg %p35
      %p42 = scmp.eq.s32.totalorder %s12, 1
      %p43 = por %p41, %p42
      %p44 = scmp.ne.s32.totalorder %s36, %s39
      %p45 = scmp.eq.s32.totalorder %s12, 0
      %p46 = por %p44, %p45
      %p47 = scmp.ne.s32.totalorder %s36, %s39
      %p48 = scmp.eq.s32.totalorder %s17, 1
      %p49 = por %p47, %p48
      %p50 = scmp.ne.s32.totalorder %s39, %s40
      %p51 = scmp.eq.s32.totalorder %s17, 0
      %p52 = por %p50, %p51
      %p53 = scmp.ne.s32.totalorder %s39, %s40
      %p54 = scmp.eq.s32.totalorder %s18, 1
      %p55 = por %p53, %p54
      %p57 = scmp.ne.s32.totalorder %s40, %s56
      %p58 = scmp.eq.s32.totalorder %s18, 0
      %p59 = por %p57, %p58
      %s61 = sadd.s32 %s60, 1
      %p64 = scmp.eq.s32.totalorder %s12, 1
      %p65 = scmp.ne.s32.totalorder %s60, %s62
      %p66 = scmp.eq.s32.totalorder %s12, 0
      %p67 = por %p65, %p66
      %p68 = scmp.ne.s32.totalorder %s60, %s62
      %p69 = scmp.eq.s32.totalorder %s17, 1
      %p70 = por %p68, %p69
      %p71 = scmp.ne.s32.totalorder %s62, %s63
      %p72 = scmp.eq.s32.totalorder %s17, 0
      %p73 = por %p71, %p72
      %p74 = scmp.ne.s32.totalorder %s62, %s63
      %p75 = scmp.eq.s32.totalorder %s18, 1
      %p76 = por %p74, %p75
      %p78 = scmp.ne.s32.totalorder %s63, %s77
      %p79 = scmp.eq.s32.totalorder %s18, 0
      %p80 = por %p78, %p79
      %s81 = ssub.s32 %s19, %s31
      %p82 = scmp.eq.s32.totalorder %s81, 0
      %s84 = sadd.s32 %s83, 1
      %s85 = scalar_select %p82, %s83, %s84
      %p88 = pneg %p82
      %p89 = scmp.eq.s32.totalorder %s12, 1
      %p90 = por %p88, %p89
      %p91 = scmp.ne.s32.totalorder %s83, %s86
      %p92 = scmp.eq.s32.totalorder %s12, 0
      %p93 = por %p91, %p92
      %p94 = scmp.ne.s32.totalorder %s83, %s86
      %p95 = scmp.eq.s32.totalorder %s17, 1
      %p96 = por %p94, %p95
      %p97 = scmp.ne.s32.totalorder %s86, %s87
      %p98 = scmp.eq.s32.totalorder %s17, 0
      %p99 = por %p97, %p98
      %p100 = scmp.ne.s32.totalorder %s86, %s87
      %p101 = scmp.eq.s32.totalorder %s18, 1
      %p102 = por %p100, %p101
      %p104 = scmp.ne.s32.totalorder %s87, %s103
      %p105 = scmp.eq.s32.totalorder %s18, 0
      %p106 = por %p104, %p105
      %s107 = sadd.s32 %s20, %s19
      %s108 = sadd.s32 %s27, %s31
      %s109 = ssub.s32 %s107, %s108
      %p110 = scmp.eq.s32.totalorder %s109, 0
      %s112 = sadd.s32 %s111, 1
      %s113 = scalar_select %p110, %s111, %s112
      %p116 = pneg %p110
      %p117 = scmp.eq.s32.totalorder %s12, 1
      %p118 = por %p116, %p117
      %p119 = scmp.ne.s32.totalorder %s111, %s114
      %p120 = scmp.eq.s32.totalorder %s12, 0
      %p121 = por %p119, %p120
      %p122 = scmp.ne.s32.totalorder %s111, %s114
      %p123 = scmp.eq.s32.totalorder %s17, 1
      %p124 = por %p122, %p123
      %p125 = scmp.ne.s32.totalorder %s114, %s115
      %p126 = scmp.eq.s32.totalorder %s17, 0
      %p127 = por %p125, %p126
      %p128 = scmp.ne.s32.totalorder %s114, %s115
      %p129 = scmp.eq.s32.totalorder %s18, 1
      %p130 = por %p128, %p129
      %p132 = scmp.ne.s32.totalorder %s115, %s131
      %p133 = scmp.eq.s32.totalorder %s18, 0
      %p134 = por %p132, %p133
      %p135 = scmp.le.s32.totalorder 1, %s12
      %p136 = scmp.lt.s32.totalorder %s12, 3
      %p137 = pnand %p135, %p136
      %p138 = pneg %p137
      // Predicated region
      $region9: #{tpu_custom_call.1} parent=5 // pred_check
        _
      $region10: #{tpu_custom_call.1} parent=5 // pred_check_branch
        %140 = sbr.rel (%p137) target = $region12
      $region11: #{tpu_custom_call.1} parent=5 // pred_region
        %s141 = ssub.s32 %s12, 1
        // Predicated region
        $region13: #{tpu_custom_call.1} parent=11 // pred_check
          %p142 = pneg %p73
        $region14: #{tpu_custom_call.1} parent=11 // pred_check_branch
          %144 = sbr.rel (%p142) target = $region16
        $region15: #{tpu_custom_call.1} parent=11 // pred_region
          _
        $region16: #{tpu_custom_call.1} parent=11 // pred_fallthru
          _
        // Predicated region
        $region17: #{tpu_custom_call.1} parent=11 // pred_check
          %p145 = pneg %p99
        $region18: #{tpu_custom_call.1} parent=11 // pred_check_branch
          %147 = sbr.rel (%p145) target = $region20
        $region19: #{tpu_custom_call.1} parent=11 // pred_region
          %s148 = smul.u32 8, %s21
          %p149 = scmp.lt.s32.totalorder %s148, 7
          %s150 = scalar_select %p149, %s148, 7
          %s151 = smul.addr %s150, 8
          %s152 = scalar_lea.vmem %s2, %s151
          %s153 = smul.u32 8, %s21
        $region20: #{tpu_custom_call.1} parent=11 // pred_fallthru
          _
      $region12: #{tpu_custom_call.1} parent=5 // pred_fallthru
        _
      %p154 = scmp.lt.s32.totalorder %s12, 2
      // Predicated region
      $region21: #{tpu_custom_call.1} parent=5 // pred_check
        %p155 = pneg %p154
      $region22: #{tpu_custom_call.1} parent=5 // pred_check_branch
        %157 = sbr.rel (%p155) target = $region24
      $region23: #{tpu_custom_call.1} parent=5 // pred_region
        // Predicated region
        $region25: #{tpu_custom_call.1} parent=23 // pred_check
          %p158 = pneg %p46
        $region26: #{tpu_custom_call.1} parent=23 // pred_check_branch
          %160 = sbr.rel (%p158) target = $region28
        $region27: #{tpu_custom_call.1} parent=23 // pred_region
          %s161 = sadd.s32 %s20, %s19
          %s162 = smul.u32 8, %s161
          %p163 = scmp.lt.s32.totalorder %s162, 15
          %s164 = scalar_select %p163, %s162, 15
          %s165 = smul.addr %s164, 8
          %s166 = scalar_lea.vmem %s0, %s165
          %s167 = sadd.s32 %s20, %s19
          %s168 = smul.u32 8, %s167
        $region28: #{tpu_custom_call.1} parent=23 // pred_fallthru
          _
      $region24: #{tpu_custom_call.1} parent=5 // pred_fallthru
        _
      %p169 = scmp.le.s32.totalorder 1, %s12
      %p170 = scmp.lt.s32.totalorder %s12, 3
      %p171 = pnand %p169, %p170
      %p172 = pneg %p171
      // Predicated region
      $region29: #{tpu_custom_call.1} parent=5 // pred_check
        _
      $region30: #{tpu_custom_call.1} parent=5 // pred_check_branch
        %174 = sbr.rel (%p171) target = $region32
      $region31: #{tpu_custom_call.1} parent=5 // pred_region
        %s175 = ssub.s32 %s12, 1
        %s176 = sadd.s32 %s22, %s21
        %s177 = smul.u32 8, %s176
        %p178 = scmp.lt.s32.totalorder %s177, 15
        %s179 = scalar_select %p178, %s177, 15
        %s180 = smul.addr %s179, 8
        %s181 = scalar_lea.vmem %s0, %s180
        %p182 = pneg %p52
        %p183 = pneg %p49
        %p184 = pneg %p73
        %p185 = pneg %p70
        %s186 = smul.u32 8, %s21
        %p187 = scmp.lt.s32.totalorder %s186, 7
        %s188 = scalar_select %p187, %s186, 7
        %s189 = smul.addr %s188, 8
        %s190 = scalar_lea.vmem %s2, %s189
        %p191 = pneg %p99
        %p192 = pneg %p96
        %p193 = pneg %p127
        %p194 = pneg %p124
        %s195 = sand.u32 %s114, 1
        %s196 = scalar_lea.sflag [#allocation3], %s195
        %s197 = sand.u32 %s114, 1
        %s198 = smul.addr %s197, 64
        %s199 = scalar_lea.vmem [#allocation2], %s198
        %s200 = sadd.s32 %s22, %s21
        %s201 = smul.u32 8, %s200
        %p202 = scmp.lt.s32.totalorder %s201, 15
        %s203 = scalar_select %p202, %s201, 15
        %s204 = smul.addr %s203, 8
        %s205 = scalar_lea.vmem %s0, %s204
        %s206 = sadd.s32 %s22, %s21
        %s207 = smul.u32 8, %s206
        %s208 = smul.u32 8, %s21
        %p209 = scmp.lt.s32.totalorder %s208, 7
        %s210 = scalar_select %p209, %s208, 7
        %s211 = smul.addr %s210, 8
        %s212 = scalar_lea.vmem %s2, %s211
        %s213 = smul.u32 8, %s21
        %s214 = sadd.s32 %s22, %s21
        %s215 = smul.u32 8, %s214
        %v216 = vld [vmem:[%s205] sm:$0xff]
        %v217 = vld [vmem:[%s205 + $0x8] sm:$0xff]
        %v218 = vld [vmem:[%s205 + $0x10] sm:$0xff]
        %v219 = vld [vmem:[%s205 + $0x18] sm:$0xff]
        %v220 = vld [vmem:[%s205 + $0x20] sm:$0xff]
        %v221 = vld [vmem:[%s205 + $0x28] sm:$0xff]
        %v222 = vld [vmem:[%s205 + $0x30] sm:$0xff]
        %v223 = vld [vmem:[%s205 + $0x38] sm:$0xff]
        %v224 = vlaneseq
        %v225 = vand.u32 %v224, 127
        %226 = vset.pattern.permute.xlu0 0
        %227 = vperm.xlu0 %226, %v216
        %v228 = vpop.permute.xlu0 %227
        %229 = vset.pattern.permute.xlu0 0
        %230 = vperm.xlu0 %229, %v217
        %v231 = vpop.permute.xlu0 %230
        %232 = vset.pattern.permute.xlu0 0
        %233 = vperm.xlu0 %232, %v218
        %v234 = vpop.permute.xlu0 %233
        %235 = vset.pattern.permute.xlu0 0
        %236 = vperm.xlu0 %235, %v219
        %v237 = vpop.permute.xlu0 %236
        %238 = vset.pattern.permute.xlu0 0
        %239 = vperm.xlu0 %238, %v220
        %v240 = vpop.permute.xlu0 %239
        %241 = vset.pattern.permute.xlu0 0
        %242 = vperm.xlu0 %241, %v221
        %v243 = vpop.permute.xlu0 %242
        %244 = vset.pattern.permute.xlu0 0
        %245 = vperm.xlu0 %244, %v222
        %v246 = vpop.permute.xlu0 %245
        %247 = vset.pattern.permute.xlu0 0
        %248 = vperm.xlu0 %247, %v223
        %v249 = vpop.permute.xlu0 %248
        %vm250 = vcmp.eq.s32.totalorder %v228, %v225
        %vm251 = vcmp.eq.s32.totalorder %v231, %v225
        %vm252 = vcmp.eq.s32.totalorder %v234, %v225
        %vm253 = vcmp.eq.s32.totalorder %v237, %v225
        %vm254 = vcmp.eq.s32.totalorder %v240, %v225
        %vm255 = vcmp.eq.s32.totalorder %v243, %v225
        %vm256 = vcmp.eq.s32.totalorder %v246, %v225
        %vm257 = vcmp.eq.s32.totalorder %v249, %v225
        %v258 = vsel %vm250, 1, 0
        %v259 = vsel %vm251, 1, 0
        %v260 = vsel %vm252, 1, 0
        %v261 = vsel %vm253, 1, 0
        %v262 = vsel %vm254, 1, 0
        %v263 = vsel %vm255, 1, 0
        %v264 = vsel %vm256, 1, 0
        %v265 = vsel %vm257, 1, 0
        %v266 = vcvt.s32.f32 %v258
        %v267 = vcvt.s32.f32 %v259
        %v268 = vcvt.s32.f32 %v260
        %v269 = vcvt.s32.f32 %v261
        %v270 = vcvt.s32.f32 %v262
        %v271 = vcvt.s32.f32 %v263
        %v272 = vcvt.s32.f32 %v264
        %v273 = vcvt.s32.f32 %v265
        %v274 = vld [vmem:[%s1] sm:$0xff]
        %v275 = vld [vmem:[%s1 + $0x8] sm:$0xff]
        %v276 = vld [vmem:[%s1 + $0x10] sm:$0xff]
        %v277 = vld [vmem:[%s1 + $0x18] sm:$0xff]
        %v278 = vld [vmem:[%s1 + $0x20] sm:$0xff]
        %v279 = vld [vmem:[%s1 + $0x28] sm:$0xff]
        %v280 = vld [vmem:[%s1 + $0x30] sm:$0xff]
        %v281 = vld [vmem:[%s1 + $0x38] sm:$0xff]
        %v282 = vld [vmem:[%s212] sm:$0xff]
        %v283 = vld [vmem:[%s212 + $0x8] sm:$0xff]
        %v284 = vld [vmem:[%s212 + $0x10] sm:$0xff]
        %v285 = vld [vmem:[%s212 + $0x18] sm:$0xff]
        %v286 = vld [vmem:[%s212 + $0x20] sm:$0xff]
        %v287 = vld [vmem:[%s212 + $0x28] sm:$0xff]
        %v288 = vld [vmem:[%s212 + $0x30] sm:$0xff]
        %v289 = vld [vmem:[%s212 + $0x38] sm:$0xff]
        %vm290 = vcmask 523264
        %v292 = vsel %vm290, %v266, 0
        %v295 = vsel %vm290, %v267, 0
        %v298 = vsel %vm290, %v268, 0
        %v301 = vsel %vm290, %v269, 0
        %v304 = vsel %vm290, %v270, 0
        %v307 = vsel %vm290, %v271, 0
        %v310 = vsel %vm290, %v272, 0
        %v313 = vsel %vm290, %v273, 0
        %315 = vmatpush.msra.mxu0 0.0
        %316 = vmatpush.msra.mxu0 0.0
        %317 = vmatpush.msra.mxu0 0.0
        %318 = vmatpush.msra.mxu0 0.0
        %319 = vmatpush.msra.mxu0 0.0
        %320 = vmatpush.msra.mxu0 0.0
        %321 = vmatpush.msra.mxu0 0.0
        %322 = vmatpush.msra.mxu0 0.0
        %v323 = vand.u32 %v281, 4294901760
        %324 = vmatpush.msra.mxu0 %v323
        %v325 = vand.u32 %v280, 4294901760
        %326 = vmatpush.msra.mxu0 %v325
        %v327 = vand.u32 %v279, 4294901760
        %328 = vmatpush.msra.mxu0 %v327
        %v329 = vand.u32 %v278, 4294901760
        %330 = vmatpush.msra.mxu0 %v329
        %v331 = vand.u32 %v277, 4294901760
        %332 = vmatpush.msra.mxu0 %v331
        %v333 = vand.u32 %v276, 4294901760
        %334 = vmatpush.msra.mxu0 %v333
        %v335 = vand.u32 %v275, 4294901760
        %336 = vmatpush.msra.mxu0 %v335
        %v337 = vand.u32 %v274, 4294901760
        %338 = vmatpush.msra.mxu0 %v337
        %v339 = vand.u32 %v292, 4294901760
        %v340 = vsub.f32 %v292, %v339
        %v341 = vand.u32 %v340, 4294901760
        %v342 = vsub.f32 %v340, %v341
        %v343 = vand.u32 %v342, 4294901760
        %344 = vmatmul.f32.gmra.mxu0 %v343
        %v345 = vpop.f32.mrf.mxu0
        %v346 = vadd.f32 %v282, %v345
        %v347 = vand.u32 %v295, 4294901760
        %v348 = vsub.f32 %v295, %v347
        %v349 = vand.u32 %v348, 4294901760
        %v350 = vsub.f32 %v348, %v349
        %v351 = vand.u32 %v350, 4294901760
        %352 = vmatmul.f32.gmra.mxu0 %v351
        %v353 = vpop.f32.mrf.mxu0
        %v354 = vadd.f32 %v283, %v353
        %v355 = vand.u32 %v298, 4294901760
        %v356 = vsub.f32 %v298, %v355
        %v357 = vand.u32 %v356, 4294901760
        %v358 = vsub.f32 %v356, %v357
        %v359 = vand.u32 %v358, 4294901760
        %360 = vmatmul.f32.gmra.mxu0 %v359
        %v361 = vpop.f32.mrf.mxu0
        %v362 = vadd.f32 %v284, %v361
        %v363 = vand.u32 %v301, 4294901760
        %v364 = vsub.f32 %v301, %v363
        %v365 = vand.u32 %v364, 4294901760
        %v366 = vsub.f32 %v364, %v365
        %v367 = vand.u32 %v366, 4294901760
        %368 = vmatmul.f32.gmra.mxu0 %v367
        %v369 = vpop.f32.mrf.mxu0
        %v370 = vadd.f32 %v285, %v369
        %v371 = vand.u32 %v304, 4294901760
        %v372 = vsub.f32 %v304, %v371
        %v373 = vand.u32 %v372, 4294901760
        %v374 = vsub.f32 %v372, %v373
        %v375 = vand.u32 %v374, 4294901760
        %376 = vmatmul.f32.gmra.mxu0 %v375
        %v377 = vpop.f32.mrf.mxu0
        %v378 = vadd.f32 %v286, %v377
        %v379 = vand.u32 %v307, 4294901760
        %v380 = vsub.f32 %v307, %v379
        %v381 = vand.u32 %v380, 4294901760
        %v382 = vsub.f32 %v380, %v381
        %v383 = vand.u32 %v382, 4294901760
        %384 = vmatmul.f32.gmra.mxu0 %v383
        %v385 = vpop.f32.mrf.mxu0
        %v386 = vadd.f32 %v287, %v385
        %v387 = vand.u32 %v310, 4294901760
        %v388 = vsub.f32 %v310, %v387
        %v389 = vand.u32 %v388, 4294901760
        %v390 = vsub.f32 %v388, %v389
        %v391 = vand.u32 %v390, 4294901760
        %392 = vmatmul.f32.gmra.mxu0 %v391
        %v393 = vpop.f32.mrf.mxu0
        %v394 = vadd.f32 %v288, %v393
        %v395 = vand.u32 %v313, 4294901760
        %v396 = vsub.f32 %v313, %v395
        %v397 = vand.u32 %v396, 4294901760
        %v398 = vsub.f32 %v396, %v397
        %v399 = vand.u32 %v398, 4294901760
        %400 = vmatmul.f32.gmra.mxu0 %v399
        %v401 = vpop.f32.mrf.mxu0
        %v402 = vadd.f32 %v289, %v401
        %403 = vdwg.mxu0
        %404 = vmatpush.msra.mxu0 0.0
        %405 = vmatpush.msra.mxu0 0.0
        %406 = vmatpush.msra.mxu0 0.0
        %407 = vmatpush.msra.mxu0 0.0
        %408 = vmatpush.msra.mxu0 0.0
        %409 = vmatpush.msra.mxu0 0.0
        %410 = vmatpush.msra.mxu0 0.0
        %411 = vmatpush.msra.mxu0 0.0
        %v412 = vand.u32 %v281, 4294901760
        %v413 = vsub.f32 %v281, %v412
        %v414 = vand.u32 %v413, 4294901760
        %v415 = vsub.f32 %v413, %v414
        %v416 = vand.u32 %v415, 4294901760
        %417 = vmatpush.msra.mxu0 %v416
        %v418 = vand.u32 %v280, 4294901760
        %v419 = vsub.f32 %v280, %v418
        %v420 = vand.u32 %v419, 4294901760
        %v421 = vsub.f32 %v419, %v420
        %v422 = vand.u32 %v421, 4294901760
        %423 = vmatpush.msra.mxu0 %v422
        %v424 = vand.u32 %v279, 4294901760
        %v425 = vsub.f32 %v279, %v424
        %v426 = vand.u32 %v425, 4294901760
        %v427 = vsub.f32 %v425, %v426
        %v428 = vand.u32 %v427, 4294901760
        %429 = vmatpush.msra.mxu0 %v428
        %v430 = vand.u32 %v278, 4294901760
        %v431 = vsub.f32 %v278, %v430
        %v432 = vand.u32 %v431, 4294901760
        %v433 = vsub.f32 %v431, %v432
        %v434 = vand.u32 %v433, 4294901760
        %435 = vmatpush.msra.mxu0 %v434
        %v436 = vand.u32 %v277, 4294901760
        %v437 = vsub.f32 %v277, %v436
        %v438 = vand.u32 %v437, 4294901760
        %v439 = vsub.f32 %v437, %v438
        %v440 = vand.u32 %v439, 4294901760
        %441 = vmatpush.msra.mxu0 %v440
        %v442 = vand.u32 %v276, 4294901760
        %v443 = vsub.f32 %v276, %v442
        %v444 = vand.u32 %v443, 4294901760
        %v445 = vsub.f32 %v443, %v444
        %v446 = vand.u32 %v445, 4294901760
        %447 = vmatpush.msra.mxu0 %v446
        %v448 = vand.u32 %v275, 4294901760
        %v449 = vsub.f32 %v275, %v448
        %v450 = vand.u32 %v449, 4294901760
        %v451 = vsub.f32 %v449, %v450
        %v452 = vand.u32 %v451, 4294901760
        %453 = vmatpush.msra.mxu0 %v452
        %v454 = vand.u32 %v274, 4294901760
        %v455 = vsub.f32 %v274, %v454
        %v456 = vand.u32 %v455, 4294901760
        %v457 = vsub.f32 %v455, %v456
        %v458 = vand.u32 %v457, 4294901760
        %459 = vmatpush.msra.mxu0 %v458
        %v460 = vand.u32 %v292, 4294901760
        %461 = vmatmul.f32.gmra.mxu0 %v460
        %v462 = vpop.f32.mrf.mxu0
        %v463 = vadd.f32 %v346, %v462
        %v464 = vand.u32 %v295, 4294901760
        %465 = vmatmul.f32.gmra.mxu0 %v464
        %v466 = vpop.f32.mrf.mxu0
        %v467 = vadd.f32 %v354, %v466
        %v468 = vand.u32 %v298, 4294901760
        %469 = vmatmul.f32.gmra.mxu0 %v468
        %v470 = vpop.f32.mrf.mxu0
        %v471 = vadd.f32 %v362, %v470
        %v472 = vand.u32 %v301, 4294901760
        %473 = vmatmul.f32.gmra.mxu0 %v472
        %v474 = vpop.f32.mrf.mxu0
        %v475 = vadd.f32 %v370, %v474
        %v476 = vand.u32 %v304, 4294901760
        %477 = vmatmul.f32.gmra.mxu0 %v476
        %v478 = vpop.f32.mrf.mxu0
        %v479 = vadd.f32 %v378, %v478
        %v480 = vand.u32 %v307, 4294901760
        %481 = vmatmul.f32.gmra.mxu0 %v480
        %v482 = vpop.f32.mrf.mxu0
        %v483 = vadd.f32 %v386, %v482
        %v484 = vand.u32 %v310, 4294901760
        %485 = vmatmul.f32.gmra.mxu0 %v484
        %v486 = vpop.f32.mrf.mxu0
        %v487 = vadd.f32 %v394, %v486
        %v488 = vand.u32 %v313, 4294901760
        %489 = vmatmul.f32.gmra.mxu0 %v488
        %v490 = vpop.f32.mrf.mxu0
        %v491 = vadd.f32 %v402, %v490
        %492 = vdwg.mxu0
        %493 = vmatpush.msra.mxu0 0.0
        %494 = vmatpush.msra.mxu0 0.0
        %495 = vmatpush.msra.mxu0 0.0
        %496 = vmatpush.msra.mxu0 0.0
        %497 = vmatpush.msra.mxu0 0.0
        %498 = vmatpush.msra.mxu0 0.0
        %499 = vmatpush.msra.mxu0 0.0
        %500 = vmatpush.msra.mxu0 0.0
        %v501 = vand.u32 %v281, 4294901760
        %v502 = vsub.f32 %v281, %v501
        %503 = vmatpush.msra.mxu0 %v502
        %v504 = vand.u32 %v280, 4294901760
        %v505 = vsub.f32 %v280, %v504
        %506 = vmatpush.msra.mxu0 %v505
        %v507 = vand.u32 %v279, 4294901760
        %v508 = vsub.f32 %v279, %v507
        %509 = vmatpush.msra.mxu0 %v508
        %v510 = vand.u32 %v278, 4294901760
        %v511 = vsub.f32 %v278, %v510
        %512 = vmatpush.msra.mxu0 %v511
        %v513 = vand.u32 %v277, 4294901760
        %v514 = vsub.f32 %v277, %v513
        %515 = vmatpush.msra.mxu0 %v514
        %v516 = vand.u32 %v276, 4294901760
        %v517 = vsub.f32 %v276, %v516
        %518 = vmatpush.msra.mxu0 %v517
        %v519 = vand.u32 %v275, 4294901760
        %v520 = vsub.f32 %v275, %v519
        %521 = vmatpush.msra.mxu0 %v520
        %v522 = vand.u32 %v274, 4294901760
        %v523 = vsub.f32 %v274, %v522
        %524 = vmatpush.msra.mxu0 %v523
        %v525 = vand.u32 %v292, 4294901760
        %v526 = vsub.f32 %v292, %v525
        %527 = vmatmul.f32.gmra.mxu0 %v526
        %v528 = vpop.f32.mrf.mxu0
        %v529 = vadd.f32 %v463, %v528
        %v530 = vand.u32 %v295, 4294901760
        %v531 = vsub.f32 %v295, %v530
        %532 = vmatmul.f32.gmra.mxu0 %v531
        %v533 = vpop.f32.mrf.mxu0
        %v534 = vadd.f32 %v467, %v533
        %v535 = vand.u32 %v298, 4294901760
        %v536 = vsub.f32 %v298, %v535
        %537 = vmatmul.f32.gmra.mxu0 %v536
        %v538 = vpop.f32.mrf.mxu0
        %v539 = vadd.f32 %v471, %v538
        %v540 = vand.u32 %v301, 4294901760
        %v541 = vsub.f32 %v301, %v540
        %542 = vmatmul.f32.gmra.mxu0 %v541
        %v543 = vpop.f32.mrf.mxu0
        %v544 = vadd.f32 %v475, %v543
        %v545 = vand.u32 %v304, 4294901760
        %v546 = vsub.f32 %v304, %v545
        %547 = vmatmul.f32.gmra.mxu0 %v546
        %v548 = vpop.f32.mrf.mxu0
        %v549 = vadd.f32 %v479, %v548
        %v550 = vand.u32 %v307, 4294901760
        %v551 = vsub.f32 %v307, %v550
        %552 = vmatmul.f32.gmra.mxu0 %v551
        %v553 = vpop.f32.mrf.mxu0
        %v554 = vadd.f32 %v483, %v553
        %v555 = vand.u32 %v310, 4294901760
        %v556 = vsub.f32 %v310, %v555
        %557 = vmatmul.f32.gmra.mxu0 %v556
        %v558 = vpop.f32.mrf.mxu0
        %v559 = vadd.f32 %v487, %v558
        %v560 = vand.u32 %v313, 4294901760
        %v561 = vsub.f32 %v313, %v560
        %562 = vmatmul.f32.gmra.mxu0 %v561
        %v563 = vpop.f32.mrf.mxu0
        %v564 = vadd.f32 %v491, %v563
        %565 = vdwg.mxu0
        %566 = vmatpush.msra.mxu0 0.0
        %567 = vmatpush.msra.mxu0 0.0
        %568 = vmatpush.msra.mxu0 0.0
        %569 = vmatpush.msra.mxu0 0.0
        %570 = vmatpush.msra.mxu0 0.0
        %571 = vmatpush.msra.mxu0 0.0
        %572 = vmatpush.msra.mxu0 0.0
        %573 = vmatpush.msra.mxu0 0.0
        %v574 = vand.u32 %v281, 4294901760
        %575 = vmatpush.msra.mxu0 %v574
        %v576 = vand.u32 %v280, 4294901760
        %577 = vmatpush.msra.mxu0 %v576
        %v578 = vand.u32 %v279, 4294901760
        %579 = vmatpush.msra.mxu0 %v578
        %v580 = vand.u32 %v278, 4294901760
        %581 = vmatpush.msra.mxu0 %v580
        %v582 = vand.u32 %v277, 4294901760
        %583 = vmatpush.msra.mxu0 %v582
        %v584 = vand.u32 %v276, 4294901760
        %585 = vmatpush.msra.mxu0 %v584
        %v586 = vand.u32 %v275, 4294901760
        %587 = vmatpush.msra.mxu0 %v586
        %v588 = vand.u32 %v274, 4294901760
        %589 = vmatpush.msra.mxu0 %v588
        %v590 = vand.u32 %v292, 4294901760
        %v591 = vsub.f32 %v292, %v590
        %v592 = vand.u32 %v591, 4294901760
        %593 = vmatmul.f32.gmra.mxu0 %v592
        %v594 = vpop.f32.mrf.mxu0
        %v595 = vadd.f32 %v529, %v594
        %v596 = vand.u32 %v295, 4294901760
        %v597 = vsub.f32 %v295, %v596
        %v598 = vand.u32 %v597, 4294901760
        %599 = vmatmul.f32.gmra.mxu0 %v598
        %v600 = vpop.f32.mrf.mxu0
        %v601 = vadd.f32 %v534, %v600
        %v602 = vand.u32 %v298, 4294901760
        %v603 = vsub.f32 %v298, %v602
        %v604 = vand.u32 %v603, 4294901760
        %605 = vmatmul.f32.gmra.mxu0 %v604
        %v606 = vpop.f32.mrf.mxu0
        %v607 = vadd.f32 %v539, %v606
        %v608 = vand.u32 %v301, 4294901760
        %v609 = vsub.f32 %v301, %v608
        %v610 = vand.u32 %v609, 4294901760
        %611 = vmatmul.f32.gmra.mxu0 %v610
        %v612 = vpop.f32.mrf.mxu0
        %v613 = vadd.f32 %v544, %v612
        %v614 = vand.u32 %v304, 4294901760
        %v615 = vsub.f32 %v304, %v614
        %v616 = vand.u32 %v615, 4294901760
        %617 = vmatmul.f32.gmra.mxu0 %v616
        %v618 = vpop.f32.mrf.mxu0
        %v619 = vadd.f32 %v549, %v618
        %v620 = vand.u32 %v307, 4294901760
        %v621 = vsub.f32 %v307, %v620
        %v622 = vand.u32 %v621, 4294901760
        %623 = vmatmul.f32.gmra.mxu0 %v622
        %v624 = vpop.f32.mrf.mxu0
        %v625 = vadd.f32 %v554, %v624
        %v626 = vand.u32 %v310, 4294901760
        %v627 = vsub.f32 %v310, %v626
        %v628 = vand.u32 %v627, 4294901760
        %629 = vmatmul.f32.gmra.mxu0 %v628
        %v630 = vpop.f32.mrf.mxu0
        %v631 = vadd.f32 %v559, %v630
        %v632 = vand.u32 %v313, 4294901760
        %v633 = vsub.f32 %v313, %v632
        %v634 = vand.u32 %v633, 4294901760
        %635 = vmatmul.f32.gmra.mxu0 %v634
        %v636 = vpop.f32.mrf.mxu0
        %v637 = vadd.f32 %v564, %v636
        %638 = vdwg.mxu0
        %639 = vmatpush.msra.mxu0 0.0
        %640 = vmatpush.msra.mxu0 0.0
        %641 = vmatpush.msra.mxu0 0.0
        %642 = vmatpush.msra.mxu0 0.0
        %643 = vmatpush.msra.mxu0 0.0
        %644 = vmatpush.msra.mxu0 0.0
        %645 = vmatpush.msra.mxu0 0.0
        %646 = vmatpush.msra.mxu0 0.0
        %v647 = vand.u32 %v281, 4294901760
        %v648 = vsub.f32 %v281, %v647
        %v649 = vand.u32 %v648, 4294901760
        %650 = vmatpush.msra.mxu0 %v649
        %v651 = vand.u32 %v280, 4294901760
        %v652 = vsub.f32 %v280, %v651
        %v653 = vand.u32 %v652, 4294901760
        %654 = vmatpush.msra.mxu0 %v653
        %v655 = vand.u32 %v279, 4294901760
        %v656 = vsub.f32 %v279, %v655
        %v657 = vand.u32 %v656, 4294901760
        %658 = vmatpush.msra.mxu0 %v657
        %v659 = vand.u32 %v278, 4294901760
        %v660 = vsub.f32 %v278, %v659
        %v661 = vand.u32 %v660, 4294901760
        %662 = vmatpush.msra.mxu0 %v661
        %v663 = vand.u32 %v277, 4294901760
        %v664 = vsub.f32 %v277, %v663
        %v665 = vand.u32 %v664, 4294901760
        %666 = vmatpush.msra.mxu0 %v665
        %v667 = vand.u32 %v276, 4294901760
        %v668 = vsub.f32 %v276, %v667
        %v669 = vand.u32 %v668, 4294901760
        %670 = vmatpush.msra.mxu0 %v669
        %v671 = vand.u32 %v275, 4294901760
        %v672 = vsub.f32 %v275, %v671
        %v673 = vand.u32 %v672, 4294901760
        %674 = vmatpush.msra.mxu0 %v673
        %v675 = vand.u32 %v274, 4294901760
        %v676 = vsub.f32 %v274, %v675
        %v677 = vand.u32 %v676, 4294901760
        %678 = vmatpush.msra.mxu0 %v677
        %v679 = vand.u32 %v292, 4294901760
        %680 = vmatmul.f32.gmra.mxu0 %v679
        %v681 = vpop.f32.mrf.mxu0
        %v682 = vadd.f32 %v595, %v681
        %v683 = vand.u32 %v295, 4294901760
        %684 = vmatmul.f32.gmra.mxu0 %v683
        %v685 = vpop.f32.mrf.mxu0
        %v686 = vadd.f32 %v601, %v685
        %v687 = vand.u32 %v298, 4294901760
        %688 = vmatmul.f32.gmra.mxu0 %v687
        %v689 = vpop.f32.mrf.mxu0
        %v690 = vadd.f32 %v607, %v689
        %v691 = vand.u32 %v301, 4294901760
        %692 = vmatmul.f32.gmra.mxu0 %v691
        %v693 = vpop.f32.mrf.mxu0
        %v694 = vadd.f32 %v613, %v693
        %v695 = vand.u32 %v304, 4294901760
        %696 = vmatmul.f32.gmra.mxu0 %v695
        %v697 = vpop.f32.mrf.mxu0
        %v698 = vadd.f32 %v619, %v697
        %v699 = vand.u32 %v307, 4294901760
        %700 = vmatmul.f32.gmra.mxu0 %v699
        %v701 = vpop.f32.mrf.mxu0
        %v702 = vadd.f32 %v625, %v701
        %v703 = vand.u32 %v310, 4294901760
        %704 = vmatmul.f32.gmra.mxu0 %v703
        %v705 = vpop.f32.mrf.mxu0
        %v706 = vadd.f32 %v631, %v705
        %v707 = vand.u32 %v313, 4294901760
        %708 = vmatmul.f32.gmra.mxu0 %v707
        %v709 = vpop.f32.mrf.mxu0
        %v710 = vadd.f32 %v637, %v709
        %711 = vdwg.mxu0
        %712 = vmatpush.msra.mxu0 0.0
        %713 = vmatpush.msra.mxu0 0.0
        %714 = vmatpush.msra.mxu0 0.0
        %715 = vmatpush.msra.mxu0 0.0
        %716 = vmatpush.msra.mxu0 0.0
        %717 = vmatpush.msra.mxu0 0.0
        %718 = vmatpush.msra.mxu0 0.0
        %719 = vmatpush.msra.mxu0 0.0
        %v720 = vand.u32 %v281, 4294901760
        %721 = vmatpush.msra.mxu0 %v720
        %v722 = vand.u32 %v280, 4294901760
        %723 = vmatpush.msra.mxu0 %v722
        %v724 = vand.u32 %v279, 4294901760
        %725 = vmatpush.msra.mxu0 %v724
        %v726 = vand.u32 %v278, 4294901760
        %727 = vmatpush.msra.mxu0 %v726
        %v728 = vand.u32 %v277, 4294901760
        %729 = vmatpush.msra.mxu0 %v728
        %v730 = vand.u32 %v276, 4294901760
        %731 = vmatpush.msra.mxu0 %v730
        %v732 = vand.u32 %v275, 4294901760
        %733 = vmatpush.msra.mxu0 %v732
        %v734 = vand.u32 %v274, 4294901760
        %735 = vmatpush.msra.mxu0 %v734
        %v736 = vand.u32 %v292, 4294901760
        %737 = vmatmul.f32.gmra.mxu0 %v736
        %v738 = vpop.f32.mrf.mxu0
        %v739 = vadd.f32 %v682, %v738
        %v740 = vand.u32 %v295, 4294901760
        %741 = vmatmul.f32.gmra.mxu0 %v740
        %v742 = vpop.f32.mrf.mxu0
        %v743 = vadd.f32 %v686, %v742
        %v744 = vand.u32 %v298, 4294901760
        %745 = vmatmul.f32.gmra.mxu0 %v744
        %v746 = vpop.f32.mrf.mxu0
        %v747 = vadd.f32 %v690, %v746
        %v748 = vand.u32 %v301, 4294901760
        %749 = vmatmul.f32.gmra.mxu0 %v748
        %v750 = vpop.f32.mrf.mxu0
        %v751 = vadd.f32 %v694, %v750
        %v752 = vand.u32 %v304, 4294901760
        %753 = vmatmul.f32.gmra.mxu0 %v752
        %v754 = vpop.f32.mrf.mxu0
        %v755 = vadd.f32 %v698, %v754
        %v756 = vand.u32 %v307, 4294901760
        %757 = vmatmul.f32.gmra.mxu0 %v756
        %v758 = vpop.f32.mrf.mxu0
        %v759 = vadd.f32 %v702, %v758
        %v760 = vand.u32 %v310, 4294901760
        %761 = vmatmul.f32.gmra.mxu0 %v760
        %v762 = vpop.f32.mrf.mxu0
        %v763 = vadd.f32 %v706, %v762
        %v764 = vand.u32 %v313, 4294901760
        %765 = vmatmul.f32.gmra.mxu0 %v764
        %v766 = vpop.f32.mrf.mxu0
        %v767 = vadd.f32 %v710, %v766
        %768 = vdwg.mxu0
        %769 = vst [vmem:[%s199] sm:$0xff] %v739
        %770 = vst [vmem:[%s199 + $0x8] sm:$0xff] %v743
        %771 = vst [vmem:[%s199 + $0x10] sm:$0xff] %v747
        %772 = vst [vmem:[%s199 + $0x18] sm:$0xff] %v751
        %773 = vst [vmem:[%s199 + $0x20] sm:$0xff] %v755
        %774 = vst [vmem:[%s199 + $0x28] sm:$0xff] %v759
        %775 = vst [vmem:[%s199 + $0x30] sm:$0xff] %v763
        %776 = vst [vmem:[%s199 + $0x38] sm:$0xff] %v767
        %s777 = sand.u32 %s114, 1
        %s778 = scalar_lea.sflag [#allocation3], %s777
        %s779 = sand.u32 %s114, 1
        %s780 = smul.addr %s779, 64
        %s781 = scalar_lea.vmem [#allocation2], %s780
        // Predicated region
        $region33: #{tpu_custom_call.1} parent=31 // pred_check
          %p782 = pneg %p124
        $region34: #{tpu_custom_call.1} parent=31 // pred_check_branch
          %784 = sbr.rel (%p782) target = $region36
        $region35: #{tpu_custom_call.1} parent=31 // pred_region
          %s785 = sadd.s32 %s22, %s21
          %s786 = smul.u32 8, %s785
          %788 = vsyncadd %s778, 0
          %s789 = smul.addr %s786, 8
          %s790 = scalar_lea.hbm %s3, %s789
          %s791 = sshll.u32 %s781, 4
          %s792 = int_to_ptr.vmem [resolvable:$true] %s791
          %s793 = sshll.u32 %s790, 4
          %s794 = int_to_ptr.hbm [resolvable:$true] %s793
          %799 = dma.vmem_to_hbm [thread:$0]  %s792, 1024, %s794, %s778, 128, 128, 8
        $region36: #{tpu_custom_call.1} parent=31 // pred_fallthru
          _
      $region32: #{tpu_custom_call.1} parent=5 // pred_fallthru
        _
      %p800 = scmp.le.s32.totalorder 2, %s12
      // Predicated region
      $region37: #{tpu_custom_call.1} parent=5 // pred_check
        %p801 = pneg %p800
      $region38: #{tpu_custom_call.1} parent=5 // pred_check_branch
        %803 = sbr.rel (%p801) target = $region40
      $region39: #{tpu_custom_call.1} parent=5 // pred_region
        %s804 = ssub.s32 %s12, 2
        // Predicated region
        $region41: #{tpu_custom_call.1} parent=39 // pred_check
          %p805 = pneg %p130
        $region42: #{tpu_custom_call.1} parent=39 // pred_check_branch
          %807 = sbr.rel (%p805) target = $region44
        $region43: #{tpu_custom_call.1} parent=39 // pred_region
          %s808 = sand.u32 %s115, 1
          %s809 = scalar_lea.sflag [#allocation3], %s808
          %s810 = sand.u32 %s115, 1
          %s811 = smul.addr %s810, 64
          %s812 = scalar_lea.vmem [#allocation2], %s811
          %814 = dma.done %s809, 1024
        $region44: #{tpu_custom_call.1} parent=39 // pred_fallthru
          _
      $region40: #{tpu_custom_call.1} parent=5 // pred_fallthru
        _
    $region6: #{tpu_custom_call.1} parent=1 // loop_footer
      %s16 = sadd.s32 1, %s12
    $region7: #{tpu_custom_call.1} parent=1 // loop_footer_branch
      %11 = sbr.rel target = $region3
    $region8: #{tpu_custom_call.1} parent=1 // loop_exit
      _
    %815 = vsyncpa [#allocation3], 1
    %s816 = scalar_lea.sflag [#allocation3], 1
    %817 = vsyncpa %s816, 1

</llo_original>
